<compile_context>
chip_gen: v7x
topology: tpu7x:2x2x1
jax: 0.10.0
libtpu: 0.0.40
codegen_flags: <defaults>
</compile_context>

<pallas_src>
import functools

import jax
import jax.numpy as jnp
from jax.experimental import pallas as pl
from jax.experimental.pallas import tpu as pltpu


def _set2set_kernel(batch_ref, x_ref, wq_ref, wr_ref, b_ref, out_ref, *,
                    B, C, T, matmul_dtype):
    # ---------------- loop-invariant work, hoisted above the T loop ----------------
    x = x_ref[...]                                     # [N, C]  (matmul_dtype)
    N = x.shape[0]
    xT = x.T                                           # [C, N]  single transpose
    wq = wq_ref[...]                                   # [C, 4C] = W_ih^T[:C] + W_hh^T
    wr = wr_ref[...]                                   # [C, 4C] = W_ih^T[C:]
    bias = jnp.broadcast_to(b_ref[...], (B, 4 * C))    # [B, 4C] hoisted broadcast

    # Segment membership mask built in-kernel from raw ids (cheap VPU work,
    # replaces a B*N*4-byte float input).
    batch_ids = batch_ref[...]                         # [1, N] int32
    mask = jax.lax.broadcasted_iota(jnp.int32, (B, N), 0) == batch_ids   # [B, N] bool

    # Recurrent state carried as values (T is small & static -> unrolled).
    q = jnp.zeros((B, C), jnp.float32)                 # q == h for a 1-layer LSTM here
    c = jnp.zeros((B, C), jnp.float32)
    r = jnp.zeros((B, C), jnp.float32)

    for _ in range(T):
        # ---- single-layer LSTM cell, PyTorch gate order (i, f, g, o) ----
        gates = (jnp.dot(q.astype(matmul_dtype), wq,
                         preferred_element_type=jnp.float32)
                 + jnp.dot(r.astype(matmul_dtype), wr,
                           preferred_element_type=jnp.float32)
                 + bias)                               # [B, 4C] f32
        i_g = jax.nn.sigmoid(gates[:, 0 * C:1 * C])
        f_g = jax.nn.sigmoid(gates[:, 1 * C:2 * C])
        g_g = jnp.tanh(gates[:, 2 * C:3 * C])
        o_g = jax.nn.sigmoid(gates[:, 3 * C:4 * C])
        c = f_g * c + i_g * g_g
        q = o_g * jnp.tanh(c)                          # [B, C]

        # ---- content-based attention with per-segment softmax ----
        s = jnp.dot(q.astype(matmul_dtype), xT,
                    preferred_element_type=jnp.float32)            # [B, N]
        masked = jnp.where(mask, s, jnp.float32(-1e30))
        seg_max = jnp.max(masked, axis=1, keepdims=True)           # [B, 1]
        p = jnp.where(mask, jnp.exp(masked - seg_max), 0.0)        # [B, N]
        seg_sum = jnp.sum(p, axis=1, keepdims=True)                # [B, 1]

        # Un-normalized readout, then rescale at [B, C] instead of dividing [B, N].
        r_un = jnp.dot(p.astype(matmul_dtype), x,
                       preferred_element_type=jnp.float32)         # [B, C]
        r = r_un / jnp.maximum(seg_sum, jnp.float32(1e-30))        # empty-segment guard

    # Single concat + store (q_star = [q || r]) only after the loop.
    out_ref[...] = jnp.concatenate([q, r], axis=-1).astype(out_ref.dtype)


def set2set_forward(x, batch, w_ih, w_hh, b_ih, b_hh, *,
                    num_graphs, processing_steps, matmul_dtype=jnp.float32):
    N, C = x.shape
    B = int(num_graphs)
    T = int(processing_steps)

    # Host-side algebraic fusion (h == q):
    #   q_star @ W_ih^T + h @ W_hh^T == q @ (W_ih^T[:C] + W_hh^T) + r @ W_ih^T[C:]
    wih_t = w_ih.T                                       # [2C, 4C]
    w_q = (wih_t[:C] + w_hh.T).astype(matmul_dtype)      # [C, 4C]
    w_r = wih_t[C:].astype(matmul_dtype)                 # [C, 4C]
    bias = (b_ih + b_hh).reshape(1, 4 * C).astype(jnp.float32)

    x_in = x.astype(matmul_dtype)
    batch_ids = batch.astype(jnp.int32).reshape(1, N)

    kernel = functools.partial(_set2set_kernel, B=B, C=C, T=T,
                               matmul_dtype=matmul_dtype)
    vmem = pltpu.MemorySpace.VMEM
    return pl.pallas_call(
        kernel,
        out_shape=jax.ShapeDtypeStruct((B, 2 * C), jnp.float32),
        in_specs=[pl.BlockSpec(memory_space=vmem)] * 5,
        out_specs=pl.BlockSpec(memory_space=vmem),
        compiler_params=pltpu.CompilerParams(
            # Whole-x-in-VMEM design; explicit limit keeps the budget v7x-safe.
            vmem_limit_bytes=32 * 1024 * 1024),
    )(batch_ids, x_in, w_q, w_r, bias)


def set2set_reference(x, batch, w_ih, w_hh, b_ih, b_hh, *, num_graphs, processing_steps):
    """Pure-JAX reference (same math as the PyTorch forward)."""
    N, C = x.shape
    B = int(num_graphs)
    m = (batch[None, :] == jnp.arange(B, dtype=batch.dtype)[:, None]).astype(x.dtype)
    h = jnp.zeros((B, C), jnp.float32)
    c = jnp.zeros((B, C), jnp.float32)
    q_star = jnp.zeros((B, 2 * C), jnp.float32)
    bias = b_ih + b_hh
    for _ in range(processing_steps):
        gates = q_star @ w_ih.T + h @ w_hh.T + bias
        i_g = jax.nn.sigmoid(gates[:, 0 * C:1 * C])
        f_g = jax.nn.sigmoid(gates[:, 1 * C:2 * C])
        g_g = jnp.tanh(gates[:, 2 * C:3 * C])
        o_g = jax.nn.sigmoid(gates[:, 3 * C:4 * C])
        c = f_g * c + i_g * g_g
        q = o_g * jnp.tanh(c)
        h = q
        e = jnp.sum(x * q[batch], axis=-1)                       # [N]
        seg_max = jnp.max(jnp.where(m > 0, e[None, :], -1e30), axis=1)
        ex = jnp.exp(e - seg_max[batch])
        seg_sum = m @ ex
        a = ex / seg_sum[batch]
        r = m @ (a[:, None] * x)
        q_star = jnp.concatenate([q, r], axis=-1)
    return q_star


if __name__ == "__main__":
    key = jax.random.PRNGKey(0)
    k_x, k_wih, k_whh, k_bih, k_bhh = jax.random.split(key, 5)

    # Small shapes consistent with the module: N nodes, C in_channels, B graphs, T steps.
    N, C, B, T = 16, 32, 2, 3
    x = jax.random.normal(k_x, (N, C), dtype=jnp.float32)
    # irregular segment sizes (7 and 9 nodes)
    batch = jnp.array([0] * 7 + [1] * 9, dtype=jnp.int32)

    # LSTM(input=2C, hidden=C, num_layers=1) parameters, PyTorch-style uniform init.
    bound = 1.0 / jnp.sqrt(jnp.float32(C))
    w_ih = jax.random.uniform(k_wih, (4 * C, 2 * C), jnp.float32, -bound, bound)
    w_hh = jax.random.uniform(k_whh, (4 * C, C), jnp.float32, -bound, bound)
    b_ih = jax.random.uniform(k_bih, (4 * C,), jnp.float32, -bound, bound)
    b_hh = jax.random.uniform(k_bhh, (4 * C,), jnp.float32, -bound, bound)

    ref = set2set_reference(x, batch, w_ih, w_hh, b_ih, b_hh,
                            num_graphs=B, processing_steps=T)

    # f32 matmul inputs: tight numerical check.
    out = set2set_forward(x, batch, w_ih, w_hh, b_ih, b_hh,
                          num_graphs=B, processing_steps=T,
                          matmul_dtype=jnp.float32)
    out = jax.block_until_ready(out)
    assert out.shape == (B, 2 * C)
    assert jnp.allclose(out, ref, atol=1e-4, rtol=1e-4), "f32 mismatch vs reference"

    # bf16 matmul inputs (v6e/v7x fast path), f32 accumulation & activations: loose check.
    out_bf16 = set2set_forward(x, batch, w_ih, w_hh, b_ih, b_hh,
                               num_graphs=B, processing_steps=T,
                               matmul_dtype=jnp.bfloat16)
    out_bf16 = jax.block_until_ready(out_bf16)
    assert jnp.allclose(out_bf16, ref, atol=3e-2, rtol=3e-2), "bf16 mismatch vs reference"

    print("KERNEL_OK")
</pallas_src>

<mosaic_0001>
module attributes {stable_mosaic.version = 11 : i64} {
  func.func @_set2set_kernel(%arg0: memref<1x16xi32, #tpu.memory_space<vmem>>, %arg1: memref<16x32xf32, #tpu.memory_space<vmem>>, %arg2: memref<32x128xf32, #tpu.memory_space<vmem>>, %arg3: memref<32x128xf32, #tpu.memory_space<vmem>>, %arg4: memref<1x128xf32, #tpu.memory_space<vmem>>, %arg5: memref<2x64xf32, #tpu.memory_space<vmem>>) attributes {dimension_semantics = [], scalar_prefetch = 0 : i64, scratch_operands = 0 : i64, tpu.core_type = #tpu.core_type<tc>} {
    %c0 = arith.constant 0 : index
    %c0_0 = arith.constant 0 : index
    %0 = vector.load %arg1[%c0, %c0_0] : memref<16x32xf32, #tpu.memory_space<vmem>>, vector<16x32xf32>
    %1 = tpu.transpose %0, [1, 0] : vector<16x32xf32> -> vector<32x16xf32>
    %c0_1 = arith.constant 0 : index
    %c0_2 = arith.constant 0 : index
    %2 = vector.load %arg2[%c0_1, %c0_2] : memref<32x128xf32, #tpu.memory_space<vmem>>, vector<32x128xf32>
    %c0_3 = arith.constant 0 : index
    %c0_4 = arith.constant 0 : index
    %3 = vector.load %arg3[%c0_3, %c0_4] : memref<32x128xf32, #tpu.memory_space<vmem>>, vector<32x128xf32>
    %c0_5 = arith.constant 0 : index
    %c0_6 = arith.constant 0 : index
    %4 = vector.load %arg4[%c0_5, %c0_6] : memref<1x128xf32, #tpu.memory_space<vmem>>, vector<1x128xf32>
    %5 = vector.shape_cast %4 : vector<1x128xf32> to vector<1x128xf32>
    %6 = vector.broadcast %5 : vector<1x128xf32> to vector<2x128xf32>
    %c0_7 = arith.constant 0 : index
    %c0_8 = arith.constant 0 : index
    %7 = vector.load %arg0[%c0_7, %c0_8] : memref<1x16xi32, #tpu.memory_space<vmem>>, vector<1x16xi32>
    %8 = tpu.iota {dimensions = array<i32: 0>} : vector<2x16xi32>
    %9 = vector.broadcast %7 : vector<1x16xi32> to vector<2x16xi32>
    %10 = arith.cmpi eq, %8, %9 : vector<2x16xi32>
    %cst = arith.constant 0.000000e+00 : f32
    %11 = vector.broadcast %cst : f32 to vector<2x32xf32>
    %cst_9 = arith.constant 0.000000e+00 : f32
    %12 = vector.broadcast %cst_9 : f32 to vector<2x32xf32>
    %cst_10 = arith.constant 0.000000e+00 : f32
    %13 = vector.broadcast %cst_10 : f32 to vector<2x32xf32>
    %cst_11 = arith.constant dense<0.000000e+00> : vector<2x128xf32>
    %14 = tpu.matmul %11, %2, %cst_11 {dimension_numbers = #tpu.dot_dimension_numbers<[1], [0], [0], [1], [0, 0, 1, 1], [], []>} : vector<2x32xf32>, vector<32x128xf32>, vector<2x128xf32> -> vector<2x128xf32>
    %cst_12 = arith.constant dense<0.000000e+00> : vector<2x128xf32>
    %15 = tpu.matmul %13, %3, %cst_12 {dimension_numbers = #tpu.dot_dimension_numbers<[1], [0], [0], [1], [0, 0, 1, 1], [], []>} : vector<2x32xf32>, vector<32x128xf32>, vector<2x128xf32> -> vector<2x128xf32>
    %16 = arith.addf %14, %15 : vector<2x128xf32>
    %17 = arith.addf %16, %6 : vector<2x128xf32>
    %18 = vector.extract_strided_slice %17 {offsets = [0, 0], sizes = [2, 32], strides = [1, 1]} : vector<2x128xf32> to vector<2x32xf32>
    %19 = arith.negf %18 : vector<2x32xf32>
    %20 = math.exp %19 : vector<2x32xf32>
    %cst_13 = arith.constant 1.000000e+00 : f32
    %21 = vector.broadcast %cst_13 : f32 to vector<2x32xf32>
    %22 = arith.addf %21, %20 : vector<2x32xf32>
    %23 = arith.divf %21, %22 : vector<2x32xf32>
    %24 = vector.extract_strided_slice %17 {offsets = [0, 32], sizes = [2, 32], strides = [1, 1]} : vector<2x128xf32> to vector<2x32xf32>
    %25 = arith.negf %24 : vector<2x32xf32>
    %26 = math.exp %25 : vector<2x32xf32>
    %cst_14 = arith.constant 1.000000e+00 : f32
    %27 = vector.broadcast %cst_14 : f32 to vector<2x32xf32>
    %28 = arith.addf %27, %26 : vector<2x32xf32>
    %29 = arith.divf %27, %28 : vector<2x32xf32>
    %30 = vector.extract_strided_slice %17 {offsets = [0, 64], sizes = [2, 32], strides = [1, 1]} : vector<2x128xf32> to vector<2x32xf32>
    %31 = math.tanh %30 : vector<2x32xf32>
    %32 = vector.extract_strided_slice %17 {offsets = [0, 96], sizes = [2, 32], strides = [1, 1]} : vector<2x128xf32> to vector<2x32xf32>
    %33 = arith.negf %32 : vector<2x32xf32>
    %34 = math.exp %33 : vector<2x32xf32>
    %cst_15 = arith.constant 1.000000e+00 : f32
    %35 = vector.broadcast %cst_15 : f32 to vector<2x32xf32>
    %36 = arith.addf %35, %34 : vector<2x32xf32>
    %37 = arith.divf %35, %36 : vector<2x32xf32>
    %38 = arith.mulf %29, %12 : vector<2x32xf32>
    %39 = arith.mulf %23, %31 : vector<2x32xf32>
    %40 = arith.addf %38, %39 : vector<2x32xf32>
    %41 = math.tanh %40 : vector<2x32xf32>
    %42 = arith.mulf %37, %41 : vector<2x32xf32>
    %cst_16 = arith.constant dense<0.000000e+00> : vector<2x16xf32>
    %43 = tpu.matmul %42, %1, %cst_16 {dimension_numbers = #tpu.dot_dimension_numbers<[1], [0], [0], [1], [0, 0, 1, 1], [], []>} : vector<2x32xf32>, vector<32x16xf32>, vector<2x16xf32> -> vector<2x16xf32>
    %cst_17 = arith.constant -1.000000e+30 : f32
    %44 = vector.broadcast %cst_17 : f32 to vector<2x16xf32>
    %45 = arith.select %10, %43, %44 : vector<2x16xi1>, vector<2x16xf32>
    %cst_18 = arith.constant dense<0xFF800000> : vector<2xf32>
    %46 = vector.multi_reduction <maximumf>, %45, %cst_18 [1] : vector<2x16xf32> to vector<2xf32>
    %47 = vector.shape_cast %46 : vector<2xf32> to vector<2x1xf32>
    %48 = vector.broadcast %47 : vector<2x1xf32> to vector<2x16xf32>
    %49 = arith.subf %45, %48 : vector<2x16xf32>
    %50 = math.exp %49 : vector<2x16xf32>
    %cst_19 = arith.constant 0.000000e+00 : f32
    %51 = vector.broadcast %cst_19 : f32 to vector<2x16xf32>
    %52 = arith.select %10, %50, %51 : vector<2x16xi1>, vector<2x16xf32>
    %cst_20 = arith.constant dense<0.000000e+00> : vector<2xf32>
    %53 = vector.multi_reduction <add>, %52, %cst_20 [1] : vector<2x16xf32> to vector<2xf32>
    %54 = vector.shape_cast %53 : vector<2xf32> to vector<2x1xf32>
    %cst_21 = arith.constant dense<0.000000e+00> : vector<2x32xf32>
    %55 = tpu.matmul %52, %0, %cst_21 {dimension_numbers = #tpu.dot_dimension_numbers<[1], [0], [0], [1], [0, 0, 1, 1], [], []>} : vector<2x16xf32>, vector<16x32xf32>, vector<2x32xf32> -> vector<2x32xf32>
    %cst_22 = arith.constant 1.000000e-30 : f32
    %56 = vector.broadcast %cst_22 : f32 to vector<2x1xf32>
    %57 = arith.maximumf %54, %56 : vector<2x1xf32>
    %58 = vector.broadcast %57 : vector<2x1xf32> to vector<2x32xf32>
    %59 = arith.divf %55, %58 : vector<2x32xf32>
    %cst_23 = arith.constant dense<0.000000e+00> : vector<2x128xf32>
    %60 = tpu.matmul %42, %2, %cst_23 {dimension_numbers = #tpu.dot_dimension_numbers<[1], [0], [0], [1], [0, 0, 1, 1], [], []>} : vector<2x32xf32>, vector<32x128xf32>, vector<2x128xf32> -> vector<2x128xf32>
    %cst_24 = arith.constant dense<0.000000e+00> : vector<2x128xf32>
    %61 = tpu.matmul %59, %3, %cst_24 {dimension_numbers = #tpu.dot_dimension_numbers<[1], [0], [0], [1], [0, 0, 1, 1], [], []>} : vector<2x32xf32>, vector<32x128xf32>, vector<2x128xf32> -> vector<2x128xf32>
    %62 = arith.addf %60, %61 : vector<2x128xf32>
    %63 = arith.addf %62, %6 : vector<2x128xf32>
    %64 = vector.extract_strided_slice %63 {offsets = [0, 0], sizes = [2, 32], strides = [1, 1]} : vector<2x128xf32> to vector<2x32xf32>
    %65 = arith.negf %64 : vector<2x32xf32>
    %66 = math.exp %65 : vector<2x32xf32>
    %cst_25 = arith.constant 1.000000e+00 : f32
    %67 = vector.broadcast %cst_25 : f32 to vector<2x32xf32>
    %68 = arith.addf %67, %66 : vector<2x32xf32>
    %69 = arith.divf %67, %68 : vector<2x32xf32>
    %70 = vector.extract_strided_slice %63 {offsets = [0, 32], sizes = [2, 32], strides = [1, 1]} : vector<2x128xf32> to vector<2x32xf32>
    %71 = arith.negf %70 : vector<2x32xf32>
    %72 = math.exp %71 : vector<2x32xf32>
    %cst_26 = arith.constant 1.000000e+00 : f32
    %73 = vector.broadcast %cst_26 : f32 to vector<2x32xf32>
    %74 = arith.addf %73, %72 : vector<2x32xf32>
    %75 = arith.divf %73, %74 : vector<2x32xf32>
    %76 = vector.extract_strided_slice %63 {offsets = [0, 64], sizes = [2, 32], strides = [1, 1]} : vector<2x128xf32> to vector<2x32xf32>
    %77 = math.tanh %76 : vector<2x32xf32>
    %78 = vector.extract_strided_slice %63 {offsets = [0, 96], sizes = [2, 32], strides = [1, 1]} : vector<2x128xf32> to vector<2x32xf32>
    %79 = arith.negf %78 : vector<2x32xf32>
    %80 = math.exp %79 : vector<2x32xf32>
    %cst_27 = arith.constant 1.000000e+00 : f32
    %81 = vector.broadcast %cst_27 : f32 to vector<2x32xf32>
    %82 = arith.addf %81, %80 : vector<2x32xf32>
    %83 = arith.divf %81, %82 : vector<2x32xf32>
    %84 = arith.mulf %75, %40 : vector<2x32xf32>
    %85 = arith.mulf %69, %77 : vector<2x32xf32>
    %86 = arith.addf %84, %85 : vector<2x32xf32>
    %87 = math.tanh %86 : vector<2x32xf32>
    %88 = arith.mulf %83, %87 : vector<2x32xf32>
    %cst_28 = arith.constant dense<0.000000e+00> : vector<2x16xf32>
    %89 = tpu.matmul %88, %1, %cst_28 {dimension_numbers = #tpu.dot_dimension_numbers<[1], [0], [0], [1], [0, 0, 1, 1], [], []>} : vector<2x32xf32>, vector<32x16xf32>, vector<2x16xf32> -> vector<2x16xf32>
    %cst_29 = arith.constant -1.000000e+30 : f32
    %90 = vector.broadcast %cst_29 : f32 to vector<2x16xf32>
    %91 = arith.select %10, %89, %90 : vector<2x16xi1>, vector<2x16xf32>
    %cst_30 = arith.constant dense<0xFF800000> : vector<2xf32>
    %92 = vector.multi_reduction <maximumf>, %91, %cst_30 [1] : vector<2x16xf32> to vector<2xf32>
    %93 = vector.shape_cast %92 : vector<2xf32> to vector<2x1xf32>
    %94 = vector.broadcast %93 : vector<2x1xf32> to vector<2x16xf32>
    %95 = arith.subf %91, %94 : vector<2x16xf32>
    %96 = math.exp %95 : vector<2x16xf32>
    %cst_31 = arith.constant 0.000000e+00 : f32
    %97 = vector.broadcast %cst_31 : f32 to vector<2x16xf32>
    %98 = arith.select %10, %96, %97 : vector<2x16xi1>, vector<2x16xf32>
    %cst_32 = arith.constant dense<0.000000e+00> : vector<2xf32>
    %99 = vector.multi_reduction <add>, %98, %cst_32 [1] : vector<2x16xf32> to vector<2xf32>
    %100 = vector.shape_cast %99 : vector<2xf32> to vector<2x1xf32>
    %cst_33 = arith.constant dense<0.000000e+00> : vector<2x32xf32>
    %101 = tpu.matmul %98, %0, %cst_33 {dimension_numbers = #tpu.dot_dimension_numbers<[1], [0], [0], [1], [0, 0, 1, 1], [], []>} : vector<2x16xf32>, vector<16x32xf32>, vector<2x32xf32> -> vector<2x32xf32>
    %cst_34 = arith.constant 1.000000e-30 : f32
    %102 = vector.broadcast %cst_34 : f32 to vector<2x1xf32>
    %103 = arith.maximumf %100, %102 : vector<2x1xf32>
    %104 = vector.broadcast %103 : vector<2x1xf32> to vector<2x32xf32>
    %105 = arith.divf %101, %104 : vector<2x32xf32>
    %cst_35 = arith.constant dense<0.000000e+00> : vector<2x128xf32>
    %106 = tpu.matmul %88, %2, %cst_35 {dimension_numbers = #tpu.dot_dimension_numbers<[1], [0], [0], [1], [0, 0, 1, 1], [], []>} : vector<2x32xf32>, vector<32x128xf32>, vector<2x128xf32> -> vector<2x128xf32>
    %cst_36 = arith.constant dense<0.000000e+00> : vector<2x128xf32>
    %107 = tpu.matmul %105, %3, %cst_36 {dimension_numbers = #tpu.dot_dimension_numbers<[1], [0], [0], [1], [0, 0, 1, 1], [], []>} : vector<2x32xf32>, vector<32x128xf32>, vector<2x128xf32> -> vector<2x128xf32>
    %108 = arith.addf %106, %107 : vector<2x128xf32>
    %109 = arith.addf %108, %6 : vector<2x128xf32>
    %110 = vector.extract_strided_slice %109 {offsets = [0, 0], sizes = [2, 32], strides = [1, 1]} : vector<2x128xf32> to vector<2x32xf32>
    %111 = arith.negf %110 : vector<2x32xf32>
    %112 = math.exp %111 : vector<2x32xf32>
    %cst_37 = arith.constant 1.000000e+00 : f32
    %113 = vector.broadcast %cst_37 : f32 to vector<2x32xf32>
    %114 = arith.addf %113, %112 : vector<2x32xf32>
    %115 = arith.divf %113, %114 : vector<2x32xf32>
    %116 = vector.extract_strided_slice %109 {offsets = [0, 32], sizes = [2, 32], strides = [1, 1]} : vector<2x128xf32> to vector<2x32xf32>
    %117 = arith.negf %116 : vector<2x32xf32>
    %118 = math.exp %117 : vector<2x32xf32>
    %cst_38 = arith.constant 1.000000e+00 : f32
    %119 = vector.broadcast %cst_38 : f32 to vector<2x32xf32>
    %120 = arith.addf %119, %118 : vector<2x32xf32>
    %121 = arith.divf %119, %120 : vector<2x32xf32>
    %122 = vector.extract_strided_slice %109 {offsets = [0, 64], sizes = [2, 32], strides = [1, 1]} : vector<2x128xf32> to vector<2x32xf32>
    %123 = math.tanh %122 : vector<2x32xf32>
    %124 = vector.extract_strided_slice %109 {offsets = [0, 96], sizes = [2, 32], strides = [1, 1]} : vector<2x128xf32> to vector<2x32xf32>
    %125 = arith.negf %124 : vector<2x32xf32>
    %126 = math.exp %125 : vector<2x32xf32>
    %cst_39 = arith.constant 1.000000e+00 : f32
    %127 = vector.broadcast %cst_39 : f32 to vector<2x32xf32>
    %128 = arith.addf %127, %126 : vector<2x32xf32>
    %129 = arith.divf %127, %128 : vector<2x32xf32>
    %130 = arith.mulf %121, %86 : vector<2x32xf32>
    %131 = arith.mulf %115, %123 : vector<2x32xf32>
    %132 = arith.addf %130, %131 : vector<2x32xf32>
    %133 = math.tanh %132 : vector<2x32xf32>
    %134 = arith.mulf %129, %133 : vector<2x32xf32>
    %cst_40 = arith.constant dense<0.000000e+00> : vector<2x16xf32>
    %135 = tpu.matmul %134, %1, %cst_40 {dimension_numbers = #tpu.dot_dimension_numbers<[1], [0], [0], [1], [0, 0, 1, 1], [], []>} : vector<2x32xf32>, vector<32x16xf32>, vector<2x16xf32> -> vector<2x16xf32>
    %cst_41 = arith.constant -1.000000e+30 : f32
    %136 = vector.broadcast %cst_41 : f32 to vector<2x16xf32>
    %137 = arith.select %10, %135, %136 : vector<2x16xi1>, vector<2x16xf32>
    %cst_42 = arith.constant dense<0xFF800000> : vector<2xf32>
    %138 = vector.multi_reduction <maximumf>, %137, %cst_42 [1] : vector<2x16xf32> to vector<2xf32>
    %139 = vector.shape_cast %138 : vector<2xf32> to vector<2x1xf32>
    %140 = vector.broadcast %139 : vector<2x1xf32> to vector<2x16xf32>
    %141 = arith.subf %137, %140 : vector<2x16xf32>
    %142 = math.exp %141 : vector<2x16xf32>
    %cst_43 = arith.constant 0.000000e+00 : f32
    %143 = vector.broadcast %cst_43 : f32 to vector<2x16xf32>
    %144 = arith.select %10, %142, %143 : vector<2x16xi1>, vector<2x16xf32>
    %cst_44 = arith.constant dense<0.000000e+00> : vector<2xf32>
    %145 = vector.multi_reduction <add>, %144, %cst_44 [1] : vector<2x16xf32> to vector<2xf32>
    %146 = vector.shape_cast %145 : vector<2xf32> to vector<2x1xf32>
    %cst_45 = arith.constant dense<0.000000e+00> : vector<2x32xf32>
    %147 = tpu.matmul %144, %0, %cst_45 {dimension_numbers = #tpu.dot_dimension_numbers<[1], [0], [0], [1], [0, 0, 1, 1], [], []>} : vector<2x16xf32>, vector<16x32xf32>, vector<2x32xf32> -> vector<2x32xf32>
    %cst_46 = arith.constant 1.000000e-30 : f32
    %148 = vector.broadcast %cst_46 : f32 to vector<2x1xf32>
    %149 = arith.maximumf %146, %148 : vector<2x1xf32>
    %150 = vector.broadcast %149 : vector<2x1xf32> to vector<2x32xf32>
    %151 = arith.divf %147, %150 : vector<2x32xf32>
    %152 = tpu.concatenate %134, %151 in 1 : vector<2x32xf32>, vector<2x32xf32> -> vector<2x64xf32>
    %c0_47 = arith.constant 0 : index
    %c0_48 = arith.constant 0 : index
    %153 = vector.load %arg5[%c0_47, %c0_48] : memref<2x64xf32, #tpu.memory_space<vmem>>, vector<2x64xf32>
    tpu.vector_store %arg5[%c0_47, %c0_48], %152 {strides = array<i32>} : memref<2x64xf32, #tpu.memory_space<vmem>>, vector<2x64xf32>,
    return
  }
}

</mosaic_0001>

<llo_original>
// kernel: tpu_custom_call.1
$region0: #{tpu_custom_call.1}
  #allocation0 [shape = 'u32[]', space=smem, size = 0x4, offset = 0x4, fixed_abs, tag = 'smem constant byte address 0x4 - core index']
  #allocation1 [shape = 'u32[144,128]{1,0:T(1,128)}', space=vmem, size = 0x12000, scoped, tag = 'internal scratch']
  %s0 = inlined_call_operand.hbm [shape: s32[1,16], index: 0, kind: input, shape index: {}]
  %s1 = inlined_call_operand.hbm [shape: f32[16,32], index: 1, kind: input, shape index: {}]
  %s2 = inlined_call_operand.hbm [shape: f32[32,128], index: 2, kind: input, shape index: {}]
  %s3 = inlined_call_operand.hbm [shape: f32[32,128], index: 3, kind: input, shape index: {}]
  %s4 = inlined_call_operand.vmem [shape: f32[1,128], index: 4, kind: input, shape index: {}]
  %s5 = inlined_call_operand.hbm [shape: f32[2,64], index: 5, kind: output, shape index: {}]
  %s6 = sld [smem:[#allocation0]]
  $region46: #{tpu_custom_call.1} parent=0
    _
  %s8 = ssub.s32 1, %s6
  %s9 = scalar_select 0, %s8, %s6
  $region1: #{tpu_custom_call.1} parent=0
    #allocation2 [shape = 'u8[512]{0}', space=vmem, size = 0x400, scoped, tag = 'input window, operand 0, single buffered']
    #allocation3 [shape = 's32[1]{0}', space=sflag, size = 0x4, scoped, tag = 'scoped memory for tpu_custom_call.1']
    #allocation4 [shape = 's32[1]{0}', space=sflag, size = 0x4, scoped, tag = 'scoped memory for tpu_custom_call.1']
    #allocation5 [shape = 'u8[8192]{0}', space=vmem, size = 0x2000, scoped, tag = 'input window, operand 1, single buffered']
    #allocation6 [shape = 's32[1]{0}', space=sflag, size = 0x4, scoped, tag = 'scoped memory for tpu_custom_call.1']
    #allocation7 [shape = 'u8[16384]{0}', space=vmem, size = 0x4000, scoped, tag = 'input window, operand 2, single buffered']
    #allocation8 [shape = 'u8[16384]{0}', space=vmem, size = 0x4000, scoped, tag = 'input window, operand 3, single buffered']
    #allocation9 [shape = 's32[1]{0}', space=sflag, size = 0x4, scoped, tag = 'scoped memory for tpu_custom_call.1']
    #allocation10 [shape = 'u8[1024]{0}', space=vmem, size = 0x400, scoped, tag = 'output window, operand 0, single buffered']
    %10 = vsyncpa [#allocation3], 0
    %11 = vsyncpa [#allocation6], 0
    %12 = vsyncpa [#allocation9], 0
    %13 = vsyncpa [#allocation4], 0
    // Predicated region
    $region2: #{tpu_custom_call.1} parent=1 // pred_check
      _
    $region3: #{tpu_custom_call.1} parent=1 // pred_check_branch
      %15 = sbr.rel (0) target = $region5
    $region4: #{tpu_custom_call.1} parent=1 // pred_region
      %s17 = ssub.s32 16, 16
      %18 = vsyncadd [#allocation3], %s17
      %s20 = sshll.u32 [#allocation2], 4
      %s21 = int_to_ptr.vmem [resolvable:$true] %s20
      %23 = dma.hbm_to_vmem [thread:$0]  %s0, 16, %s21, [#allocation3]
    $region5: #{tpu_custom_call.1} parent=1 // pred_fallthru
      _
    // Predicated region
    $region6: #{tpu_custom_call.1} parent=1 // pred_check
      _
    $region7: #{tpu_custom_call.1} parent=1 // pred_check_branch
      %25 = sbr.rel (0) target = $region9
    $region8: #{tpu_custom_call.1} parent=1 // pred_region
      %s27 = ssub.s32 256, 256
      %28 = vsyncadd [#allocation6], %s27
      %s29 = sshll.u32 [#allocation5], 4
      %s30 = int_to_ptr.vmem [resolvable:$true] %s29
      %35 = dma.hbm_to_vmem [thread:$0]  %s1, 256, %s30, [#allocation6], 128, 128, 8
    $region9: #{tpu_custom_call.1} parent=1 // pred_fallthru
      _
    // Predicated region
    $region10: #{tpu_custom_call.1} parent=1 // pred_check
      _
    $region11: #{tpu_custom_call.1} parent=1 // pred_check_branch
      %37 = sbr.rel (0) target = $region13
    $region12: #{tpu_custom_call.1} parent=1 // pred_region
      %s39 = ssub.s32 512, 512
      %40 = vsyncadd [#allocation6], %s39
      %s41 = sshll.u32 [#allocation7], 4
      %s42 = int_to_ptr.vmem [resolvable:$true] %s41
      %47 = dma.hbm_to_vmem [thread:$0]  %s2, 512, %s42, [#allocation6], 128, 128, 8
    $region13: #{tpu_custom_call.1} parent=1 // pred_fallthru
      _
    // Predicated region
    $region14: #{tpu_custom_call.1} parent=1 // pred_check
      _
    $region15: #{tpu_custom_call.1} parent=1 // pred_check_branch
      %49 = sbr.rel (0) target = $region17
    $region16: #{tpu_custom_call.1} parent=1 // pred_region
      %s51 = ssub.s32 512, 512
      %52 = vsyncadd [#allocation9], %s51
      %s53 = sshll.u32 [#allocation8], 4
      %s54 = int_to_ptr.vmem [resolvable:$true] %s53
      %59 = dma.hbm_to_vmem [thread:$0]  %s3, 512, %s54, [#allocation9], 128, 128, 8
    $region17: #{tpu_custom_call.1} parent=1 // pred_fallthru
      _
    // Predicated region
    $region18: #{tpu_custom_call.1} parent=1 // pred_check
      _
    $region19: #{tpu_custom_call.1} parent=1 // pred_check_branch
      %61 = sbr.rel (0) target = $region21
    $region20: #{tpu_custom_call.1} parent=1 // pred_region
      _
    $region21: #{tpu_custom_call.1} parent=1 // pred_fallthru
      _
    // Predicated region
    $region22: #{tpu_custom_call.1} parent=1 // pred_check
      _
    $region23: #{tpu_custom_call.1} parent=1 // pred_check_branch
      %63 = sbr.rel (0) target = $region25
    $region24: #{tpu_custom_call.1} parent=1 // pred_region
      %64 = dma.done [#allocation3], 16
    $region25: #{tpu_custom_call.1} parent=1 // pred_fallthru
      _
    // Predicated region
    $region26: #{tpu_custom_call.1} parent=1 // pred_check
      _
    $region27: #{tpu_custom_call.1} parent=1 // pred_check_branch
      %66 = sbr.rel (0) target = $region29
    $region28: #{tpu_custom_call.1} parent=1 // pred_region
      %67 = dma.done [#allocation6], 256
    $region29: #{tpu_custom_call.1} parent=1 // pred_fallthru
      _
    // Predicated region
    $region30: #{tpu_custom_call.1} parent=1 // pred_check
      _
    $region31: #{tpu_custom_call.1} parent=1 // pred_check_branch
      %69 = sbr.rel (0) target = $region33
    $region32: #{tpu_custom_call.1} parent=1 // pred_region
      %70 = dma.done [#allocation6], 512
    $region33: #{tpu_custom_call.1} parent=1 // pred_fallthru
      _
    // Predicated region
    $region34: #{tpu_custom_call.1} parent=1 // pred_check
      _
    $region35: #{tpu_custom_call.1} parent=1 // pred_check_branch
      %72 = sbr.rel (0) target = $region37
    $region36: #{tpu_custom_call.1} parent=1 // pred_region
      %73 = dma.done [#allocation9], 512
    $region37: #{tpu_custom_call.1} parent=1 // pred_fallthru
      _
    %v74 = vld [vmem:[#allocation5] sm:$0xff]
    %v75 = vld [vmem:[#allocation5 + $0x8] sm:$0xff]
    %v76 = vld [vmem:[#allocation7] sm:$0xff]
    %v77 = vld [vmem:[#allocation7 + $0x8] sm:$0xff]
    %v78 = vld [vmem:[#allocation7 + $0x10] sm:$0xff]
    %v79 = vld [vmem:[#allocation7 + $0x18] sm:$0xff]
    %v80 = vld [vmem:[#allocation8] sm:$0xff]
    %v81 = vld [vmem:[#allocation8 + $0x8] sm:$0xff]
    %v82 = vld [vmem:[#allocation8 + $0x10] sm:$0xff]
    %v83 = vld [vmem:[#allocation8 + $0x18] sm:$0xff]
    %v84 = vld [vmem:[%s4] sm:$0x1]
    %v86 = vlaneseq
    %v87 = vshrl.u32 %v86, 7
    %v88 = vsub.s32 0, %v87
    %v89 = vrot.slane %v84, %v88
    %v91 = vld [vmem:[#allocation2] sm:$0x1]
    %v92 = vlaneseq
    %v93 = vshrl.u32 %v92, 7
    %v94 = vlaneseq
    %v95 = vshrl.u32 %v94, 7
    %v96 = vsub.s32 0, %v95
    %v97 = vrot.slane %v91, %v96
    %vm98 = vcmp.eq.s32.totalorder %v93, %v97
    %vm99 = vcmask 261120
    %v101 = vsel %vm99, 0.0, 0
    %103 = vmatprep.subr.mxu0 0.0
    %104 = vmatpush1.msra.mxu0 %v80
    %105 = vmatprep.subr.mxu0 0.0
    %106 = vmatpush1.msra.mxu0 %v81
    %107 = vmatprep.subr.mxu0 0.0
    %108 = vmatpush1.msra.mxu0 %v82
    %109 = vmatprep.subr.mxu0 0.0
    %110 = vmatpush1.msra.mxu0 %v83
    %111 = vmatprep.subr.mxu0 0.0
    %112 = vmatpush1.msra.mxu0 0.0
    %113 = vmatprep.subr.mxu0 0.0
    %114 = vmatpush1.msra.mxu0 0.0
    %115 = vmatprep.subr.mxu0 0.0
    %116 = vmatpush1.msra.mxu0 0.0
    %117 = vmatprep.subr.mxu0 0.0
    %118 = vmatpush1.msra.mxu0 0.0
    %119 = vmatprep.subr.mxu0 0.0
    %120 = vmatpush1.msra.mxu0 0.0
    %121 = vmatprep.subr.mxu0 0.0
    %122 = vmatpush1.msra.mxu0 0.0
    %123 = vmatprep.subr.mxu0 0.0
    %124 = vmatpush1.msra.mxu0 0.0
    %125 = vmatprep.subr.mxu0 0.0
    %126 = vmatpush1.msra.mxu0 0.0
    %127 = vmatprep.subr.mxu0 0.0
    %128 = vmatpush1.msra.mxu0 0.0
    %129 = vmatprep.subr.mxu0 0.0
    %130 = vmatpush1.msra.mxu0 0.0
    %131 = vmatprep.subr.mxu0 0.0
    %132 = vmatpush1.msra.mxu0 0.0
    %133 = vmatprep.subr.mxu0 0.0
    %134 = vmatpush1.msra.mxu0 0.0
    %135 = vmatprep.subr.mxu0 0.0
    %136 = vmatpush1.msra.mxu0 0.0
    %137 = vmatprep.subr.mxu0 0.0
    %138 = vmatpush1.msra.mxu0 0.0
    %139 = vmatprep.subr.mxu0 0.0
    %140 = vmatpush1.msra.mxu0 0.0
    %141 = vmatprep.subr.mxu0 0.0
    %142 = vmatpush1.msra.mxu0 0.0
    %143 = vmatprep.subr.mxu0 0.0
    %144 = vmatpush1.msra.mxu0 0.0
    %145 = vmatprep.subr.mxu0 0.0
    %146 = vmatpush1.msra.mxu0 0.0
    %147 = vmatprep.subr.mxu0 0.0
    %148 = vmatpush1.msra.mxu0 0.0
    %149 = vmatprep.subr.mxu0 0.0
    %150 = vmatpush1.msra.mxu0 0.0
    %151 = vmatprep.subr.mxu0 0.0
    %152 = vmatpush1.msra.mxu0 0.0
    %153 = vmatprep.subr.mxu0 0.0
    %154 = vmatpush1.msra.mxu0 0.0
    %155 = vmatprep.subr.mxu0 0.0
    %156 = vmatpush1.msra.mxu0 0.0
    %157 = vmatprep.subr.mxu0 0.0
    %158 = vmatpush1.msra.mxu0 0.0
    %159 = vmatprep.subr.mxu0 0.0
    %160 = vmatpush1.msra.mxu0 0.0
    %161 = vmatprep.subr.mxu0 0.0
    %162 = vmatpush1.msra.mxu0 0.0
    %163 = vmatprep.subr.mxu0 0.0
    %164 = vmatpush1.msra.mxu0 0.0
    %165 = vmatprep.subr.mxu0 0.0
    %166 = vmatpush1.msra.mxu0 0.0
    %167 = vmatprep.mubr.f32.mxu0 0.0
    %168 = vmatmul.mubr.f32.gmra.mrb[0].mxu0 %v101
    %v169 = vpop.f32.mrb[0].mxu0
    %v170 = vadd.f32 0.0, %v169
    %v171 = vpop.f32.mrb[0].mxu0
    %172 = vdwg.mxu0
    %173 = vmatprep.subr.mxu0 0.0
    %174 = vmatpush1.msra.mxu0 %v76
    %175 = vmatprep.subr.mxu0 0.0
    %176 = vmatpush1.msra.mxu0 %v77
    %177 = vmatprep.subr.mxu0 0.0
    %178 = vmatpush1.msra.mxu0 %v78
    %179 = vmatprep.subr.mxu0 0.0
    %180 = vmatpush1.msra.mxu0 %v79
    %181 = vmatprep.subr.mxu0 0.0
    %182 = vmatpush1.msra.mxu0 0.0
    %183 = vmatprep.subr.mxu0 0.0
    %184 = vmatpush1.msra.mxu0 0.0
    %185 = vmatprep.subr.mxu0 0.0
    %186 = vmatpush1.msra.mxu0 0.0
    %187 = vmatprep.subr.mxu0 0.0
    %188 = vmatpush1.msra.mxu0 0.0
    %189 = vmatprep.subr.mxu0 0.0
    %190 = vmatpush1.msra.mxu0 0.0
    %191 = vmatprep.subr.mxu0 0.0
    %192 = vmatpush1.msra.mxu0 0.0
    %193 = vmatprep.subr.mxu0 0.0
    %194 = vmatpush1.msra.mxu0 0.0
    %195 = vmatprep.subr.mxu0 0.0
    %196 = vmatpush1.msra.mxu0 0.0
    %197 = vmatprep.subr.mxu0 0.0
    %198 = vmatpush1.msra.mxu0 0.0
    %199 = vmatprep.subr.mxu0 0.0
    %200 = vmatpush1.msra.mxu0 0.0
    %201 = vmatprep.subr.mxu0 0.0
    %202 = vmatpush1.msra.mxu0 0.0
    %203 = vmatprep.subr.mxu0 0.0
    %204 = vmatpush1.msra.mxu0 0.0
    %205 = vmatprep.subr.mxu0 0.0
    %206 = vmatpush1.msra.mxu0 0.0
    %207 = vmatprep.subr.mxu0 0.0
    %208 = vmatpush1.msra.mxu0 0.0
    %209 = vmatprep.subr.mxu0 0.0
    %210 = vmatpush1.msra.mxu0 0.0
    %211 = vmatprep.subr.mxu0 0.0
    %212 = vmatpush1.msra.mxu0 0.0
    %213 = vmatprep.subr.mxu0 0.0
    %214 = vmatpush1.msra.mxu0 0.0
    %215 = vmatprep.subr.mxu0 0.0
    %216 = vmatpush1.msra.mxu0 0.0
    %217 = vmatprep.subr.mxu0 0.0
    %218 = vmatpush1.msra.mxu0 0.0
    %219 = vmatprep.subr.mxu0 0.0
    %220 = vmatpush1.msra.mxu0 0.0
    %221 = vmatprep.subr.mxu0 0.0
    %222 = vmatpush1.msra.mxu0 0.0
    %223 = vmatprep.subr.mxu0 0.0
    %224 = vmatpush1.msra.mxu0 0.0
    %225 = vmatprep.subr.mxu0 0.0
    %226 = vmatpush1.msra.mxu0 0.0
    %227 = vmatprep.subr.mxu0 0.0
    %228 = vmatpush1.msra.mxu0 0.0
    %229 = vmatprep.subr.mxu0 0.0
    %230 = vmatpush1.msra.mxu0 0.0
    %231 = vmatprep.subr.mxu0 0.0
    %232 = vmatpush1.msra.mxu0 0.0
    %233 = vmatprep.subr.mxu0 0.0
    %234 = vmatpush1.msra.mxu0 0.0
    %235 = vmatprep.subr.mxu0 0.0
    %236 = vmatpush1.msra.mxu0 0.0
    %237 = vmatprep.mubr.f32.mxu0 0.0
    %238 = vmatmul.mubr.f32.gmra.mrb[0].mxu0 %v101
    %v239 = vpop.f32.mrb[0].mxu0
    %v240 = vadd.f32 %v170, %v239
    %v241 = vpop.f32.mrb[0].mxu0
    %242 = vdwg.mxu0
    %v243 = vadd.f32 %v240, %v89
    %v244 = vxor.u32 %v243, 2147483648
    %v245 = vmul.f32 %v244, 1.442695
    %v246 = vpow.pop %v245
    %v247 = vadd.f32 %v246, 1.0
    %v248 = vrcp.pop %v247
    %v249 = vmul.f32 1.0, %v248
    %v250 = vtanh.pop %v243
    %v251 = vmul.f32 %v249, 0.0
    %253 = vrot.lane.b32.xlu0 %v250, 64
    %v254 = vpop.permute.xlu0 %253
    %v256 = vmul.f32 %v249, %v254
    %258 = vrot.lane.b32.xlu0 %v256, 32
    %v259 = vpop.permute.xlu0 %258
    %v261 = vadd.f32 %v251, %v259
    %v262 = vtanh.pop %v261
    %264 = vrot.lane.b32.xlu0 %v262, 64
    %v265 = vpop.permute.xlu0 %264
    %v267 = vmul.f32 %v249, %v265
    %269 = vrot.lane.b32.xlu0 %v267, 32
    %v270 = vpop.permute.xlu0 %269
    %v271 = vsel %vm99, %v270, 0
    %v274 = vsel %vm99, %v74, 0
    %v277 = vsel %vm99, %v75, 0
    %279 = vmatprep.subr.mxu0 0.0
    %280 = vmatpush1.xpose.msra.mxu0 %v274
    %281 = vmatprep.subr.mxu0 0.0
    %282 = vmatpush1.xpose.msra.mxu0 %v277
    %283 = vmatprep.subr.mxu0 0.0
    %284 = vmatpush1.xpose.msra.mxu0 0.0
    %285 = vmatprep.subr.mxu0 0.0
    %286 = vmatpush1.xpose.msra.mxu0 0.0
    %287 = vmatprep.subr.mxu0 0.0
    %288 = vmatpush1.xpose.msra.mxu0 0.0
    %289 = vmatprep.subr.mxu0 0.0
    %290 = vmatpush1.xpose.msra.mxu0 0.0
    %291 = vmatprep.subr.mxu0 0.0
    %292 = vmatpush1.xpose.msra.mxu0 0.0
    %293 = vmatprep.subr.mxu0 0.0
    %294 = vmatpush1.xpose.msra.mxu0 0.0
    %295 = vmatprep.subr.mxu0 0.0
    %296 = vmatpush1.xpose.msra.mxu0 0.0
    %297 = vmatprep.subr.mxu0 0.0
    %298 = vmatpush1.xpose.msra.mxu0 0.0
    %299 = vmatprep.subr.mxu0 0.0
    %300 = vmatpush1.xpose.msra.mxu0 0.0
    %301 = vmatprep.subr.mxu0 0.0
    %302 = vmatpush1.xpose.msra.mxu0 0.0
    %303 = vmatprep.subr.mxu0 0.0
    %304 = vmatpush1.xpose.msra.mxu0 0.0
    %305 = vmatprep.subr.mxu0 0.0
    %306 = vmatpush1.xpose.msra.mxu0 0.0
    %307 = vmatprep.subr.mxu0 0.0
    %308 = vmatpush1.xpose.msra.mxu0 0.0
    %309 = vmatprep.subr.mxu0 0.0
    %310 = vmatpush1.xpose.msra.mxu0 0.0
    %311 = vmatprep.subr.mxu0 0.0
    %312 = vmatpush1.xpose.msra.mxu0 0.0
    %313 = vmatprep.subr.mxu0 0.0
    %314 = vmatpush1.xpose.msra.mxu0 0.0
    %315 = vmatprep.subr.mxu0 0.0
    %316 = vmatpush1.xpose.msra.mxu0 0.0
    %317 = vmatprep.subr.mxu0 0.0
    %318 = vmatpush1.xpose.msra.mxu0 0.0
    %319 = vmatprep.subr.mxu0 0.0
    %320 = vmatpush1.xpose.msra.mxu0 0.0
    %321 = vmatprep.subr.mxu0 0.0
    %322 = vmatpush1.xpose.msra.mxu0 0.0
    %323 = vmatprep.subr.mxu0 0.0
    %324 = vmatpush1.xpose.msra.mxu0 0.0
    %325 = vmatprep.subr.mxu0 0.0
    %326 = vmatpush1.xpose.msra.mxu0 0.0
    %327 = vmatprep.subr.mxu0 0.0
    %328 = vmatpush1.xpose.msra.mxu0 0.0
    %329 = vmatprep.subr.mxu0 0.0
    %330 = vmatpush1.xpose.msra.mxu0 0.0
    %331 = vmatprep.subr.mxu0 0.0
    %332 = vmatpush1.xpose.msra.mxu0 0.0
    %333 = vmatprep.subr.mxu0 0.0
    %334 = vmatpush1.xpose.msra.mxu0 0.0
    %335 = vmatprep.subr.mxu0 0.0
    %336 = vmatpush1.xpose.msra.mxu0 0.0
    %337 = vmatprep.subr.mxu0 0.0
    %338 = vmatpush1.xpose.msra.mxu0 0.0
    %339 = vmatprep.subr.mxu0 0.0
    %340 = vmatpush1.xpose.msra.mxu0 0.0
    %341 = vmatprep.subr.mxu0 0.0
    %342 = vmatpush1.xpose.msra.mxu0 0.0
    %343 = vmatprep.mubr.f32.mxu0 0.0
    %344 = vmatmul.mubr.f32.gmra.mrb[0].mxu0 %v271
    %v345 = vpop.f32.mrb[0].mxu0
    %v346 = vadd.f32 0.0, %v345
    %v347 = vpop.f32.mrb[0].mxu0
    %348 = vdwg.mxu0
    %v349 = vsel %vm98, %v346, -1e+30
    %vm350 = vcmask 123904
    %v351 = vsel %vm350, %v349, -inf
    %352 = vmax.xlane.f32.xlu0 %v351
    %v353 = vpop.xlane.xlu0 %352
    %v354 = vsub.f32 %v349, %v353
    %v355 = vmul.f32 %v354, 1.442695
    %v356 = vpow.pop %v355
    %v357 = vsel %vm98, %v356, 0.0
    %v358 = vsel %vm350, %v357, 0.0
    %359 = vadd.xlane.f32.xlu0 %v358
    %v360 = vpop.xlane.xlu0 %359
    %vm361 = vcmask 130048
    %v363 = vsel %vm361, %v357, 0
    %365 = vmatprep.subr.mxu0 0.0
    %366 = vmatpush1.msra.mxu0 %v74
    %367 = vmatprep.subr.mxu0 0.0
    %368 = vmatpush1.msra.mxu0 %v75
    %369 = vmatprep.subr.mxu0 0.0
    %370 = vmatpush1.msra.mxu0 0.0
    %371 = vmatprep.subr.mxu0 0.0
    %372 = vmatpush1.msra.mxu0 0.0
    %373 = vmatprep.subr.mxu0 0.0
    %374 = vmatpush1.msra.mxu0 0.0
    %375 = vmatprep.subr.mxu0 0.0
    %376 = vmatpush1.msra.mxu0 0.0
    %377 = vmatprep.subr.mxu0 0.0
    %378 = vmatpush1.msra.mxu0 0.0
    %379 = vmatprep.subr.mxu0 0.0
    %380 = vmatpush1.msra.mxu0 0.0
    %381 = vmatprep.subr.mxu0 0.0
    %382 = vmatpush1.msra.mxu0 0.0
    %383 = vmatprep.subr.mxu0 0.0
    %384 = vmatpush1.msra.mxu0 0.0
    %385 = vmatprep.subr.mxu0 0.0
    %386 = vmatpush1.msra.mxu0 0.0
    %387 = vmatprep.subr.mxu0 0.0
    %388 = vmatpush1.msra.mxu0 0.0
    %389 = vmatprep.subr.mxu0 0.0
    %390 = vmatpush1.msra.mxu0 0.0
    %391 = vmatprep.subr.mxu0 0.0
    %392 = vmatpush1.msra.mxu0 0.0
    %393 = vmatprep.subr.mxu0 0.0
    %394 = vmatpush1.msra.mxu0 0.0
    %395 = vmatprep.subr.mxu0 0.0
    %396 = vmatpush1.msra.mxu0 0.0
    %397 = vmatprep.subr.mxu0 0.0
    %398 = vmatpush1.msra.mxu0 0.0
    %399 = vmatprep.subr.mxu0 0.0
    %400 = vmatpush1.msra.mxu0 0.0
    %401 = vmatprep.subr.mxu0 0.0
    %402 = vmatpush1.msra.mxu0 0.0
    %403 = vmatprep.subr.mxu0 0.0
    %404 = vmatpush1.msra.mxu0 0.0
    %405 = vmatprep.subr.mxu0 0.0
    %406 = vmatpush1.msra.mxu0 0.0
    %407 = vmatprep.subr.mxu0 0.0
    %408 = vmatpush1.msra.mxu0 0.0
    %409 = vmatprep.subr.mxu0 0.0
    %410 = vmatpush1.msra.mxu0 0.0
    %411 = vmatprep.subr.mxu0 0.0
    %412 = vmatpush1.msra.mxu0 0.0
    %413 = vmatprep.subr.mxu0 0.0
    %414 = vmatpush1.msra.mxu0 0.0
    %415 = vmatprep.subr.mxu0 0.0
    %416 = vmatpush1.msra.mxu0 0.0
    %417 = vmatprep.subr.mxu0 0.0
    %418 = vmatpush1.msra.mxu0 0.0
    %419 = vmatprep.subr.mxu0 0.0
    %420 = vmatpush1.msra.mxu0 0.0
    %421 = vmatprep.subr.mxu0 0.0
    %422 = vmatpush1.msra.mxu0 0.0
    %423 = vmatprep.subr.mxu0 0.0
    %424 = vmatpush1.msra.mxu0 0.0
    %425 = vmatprep.subr.mxu0 0.0
    %426 = vmatpush1.msra.mxu0 0.0
    %427 = vmatprep.subr.mxu0 0.0
    %428 = vmatpush1.msra.mxu0 0.0
    %429 = vmatprep.mubr.f32.mxu0 0.0
    %430 = vmatmul.mubr.f32.gmra.mrb[0].mxu0 %v363
    %v431 = vpop.f32.mrb[0].mxu0
    %v432 = vadd.f32 0.0, %v431
    %v433 = vpop.f32.mrb[0].mxu0
    %434 = vdwg.mxu0
    %v435 = vmax.f32 %v360, 1e-30
    %v436 = vrcp.pop %v435
    %v437 = vmul.f32 %v432, %v436
    %v439 = vsel %vm99, %v437, 0
    %441 = vmatprep.subr.mxu0 0.0
    %442 = vmatpush1.msra.mxu0 %v80
    %443 = vmatprep.subr.mxu0 0.0
    %444 = vmatpush1.msra.mxu0 %v81
    %445 = vmatprep.subr.mxu0 0.0
    %446 = vmatpush1.msra.mxu0 %v82
    %447 = vmatprep.subr.mxu0 0.0
    %448 = vmatpush1.msra.mxu0 %v83
    %449 = vmatprep.subr.mxu0 0.0
    %450 = vmatpush1.msra.mxu0 0.0
    %451 = vmatprep.subr.mxu0 0.0
    %452 = vmatpush1.msra.mxu0 0.0
    %453 = vmatprep.subr.mxu0 0.0
    %454 = vmatpush1.msra.mxu0 0.0
    %455 = vmatprep.subr.mxu0 0.0
    %456 = vmatpush1.msra.mxu0 0.0
    %457 = vmatprep.subr.mxu0 0.0
    %458 = vmatpush1.msra.mxu0 0.0
    %459 = vmatprep.subr.mxu0 0.0
    %460 = vmatpush1.msra.mxu0 0.0
    %461 = vmatprep.subr.mxu0 0.0
    %462 = vmatpush1.msra.mxu0 0.0
    %463 = vmatprep.subr.mxu0 0.0
    %464 = vmatpush1.msra.mxu0 0.0
    %465 = vmatprep.subr.mxu0 0.0
    %466 = vmatpush1.msra.mxu0 0.0
    %467 = vmatprep.subr.mxu0 0.0
    %468 = vmatpush1.msra.mxu0 0.0
    %469 = vmatprep.subr.mxu0 0.0
    %470 = vmatpush1.msra.mxu0 0.0
    %471 = vmatprep.subr.mxu0 0.0
    %472 = vmatpush1.msra.mxu0 0.0
    %473 = vmatprep.subr.mxu0 0.0
    %474 = vmatpush1.msra.mxu0 0.0
    %475 = vmatprep.subr.mxu0 0.0
    %476 = vmatpush1.msra.mxu0 0.0
    %477 = vmatprep.subr.mxu0 0.0
    %478 = vmatpush1.msra.mxu0 0.0
    %479 = vmatprep.subr.mxu0 0.0
    %480 = vmatpush1.msra.mxu0 0.0
    %481 = vmatprep.subr.mxu0 0.0
    %482 = vmatpush1.msra.mxu0 0.0
    %483 = vmatprep.subr.mxu0 0.0
    %484 = vmatpush1.msra.mxu0 0.0
    %485 = vmatprep.subr.mxu0 0.0
    %486 = vmatpush1.msra.mxu0 0.0
    %487 = vmatprep.subr.mxu0 0.0
    %488 = vmatpush1.msra.mxu0 0.0
    %489 = vmatprep.subr.mxu0 0.0
    %490 = vmatpush1.msra.mxu0 0.0
    %491 = vmatprep.subr.mxu0 0.0
    %492 = vmatpush1.msra.mxu0 0.0
    %493 = vmatprep.subr.mxu0 0.0
    %494 = vmatpush1.msra.mxu0 0.0
    %495 = vmatprep.subr.mxu0 0.0
    %496 = vmatpush1.msra.mxu0 0.0
    %497 = vmatprep.subr.mxu0 0.0
    %498 = vmatpush1.msra.mxu0 0.0
    %499 = vmatprep.subr.mxu0 0.0
    %500 = vmatpush1.msra.mxu0 0.0
    %501 = vmatprep.subr.mxu0 0.0
    %502 = vmatpush1.msra.mxu0 0.0
    %503 = vmatprep.subr.mxu0 0.0
    %504 = vmatpush1.msra.mxu0 0.0
    %505 = vmatprep.mubr.f32.mxu0 0.0
    %506 = vmatmul.mubr.f32.gmra.mrb[0].mxu0 %v439
    %v507 = vpop.f32.mrb[0].mxu0
    %v508 = vadd.f32 0.0, %v507
    %v509 = vpop.f32.mrb[0].mxu0
    %510 = vdwg.mxu0
    %511 = vmatprep.subr.mxu0 0.0
    %512 = vmatpush1.msra.mxu0 %v76
    %513 = vmatprep.subr.mxu0 0.0
    %514 = vmatpush1.msra.mxu0 %v77
    %515 = vmatprep.subr.mxu0 0.0
    %516 = vmatpush1.msra.mxu0 %v78
    %517 = vmatprep.subr.mxu0 0.0
    %518 = vmatpush1.msra.mxu0 %v79
    %519 = vmatprep.subr.mxu0 0.0
    %520 = vmatpush1.msra.mxu0 0.0
    %521 = vmatprep.subr.mxu0 0.0
    %522 = vmatpush1.msra.mxu0 0.0
    %523 = vmatprep.subr.mxu0 0.0
    %524 = vmatpush1.msra.mxu0 0.0
    %525 = vmatprep.subr.mxu0 0.0
    %526 = vmatpush1.msra.mxu0 0.0
    %527 = vmatprep.subr.mxu0 0.0
    %528 = vmatpush1.msra.mxu0 0.0
    %529 = vmatprep.subr.mxu0 0.0
    %530 = vmatpush1.msra.mxu0 0.0
    %531 = vmatprep.subr.mxu0 0.0
    %532 = vmatpush1.msra.mxu0 0.0
    %533 = vmatprep.subr.mxu0 0.0
    %534 = vmatpush1.msra.mxu0 0.0
    %535 = vmatprep.subr.mxu0 0.0
    %536 = vmatpush1.msra.mxu0 0.0
    %537 = vmatprep.subr.mxu0 0.0
    %538 = vmatpush1.msra.mxu0 0.0
    %539 = vmatprep.subr.mxu0 0.0
    %540 = vmatpush1.msra.mxu0 0.0
    %541 = vmatprep.subr.mxu0 0.0
    %542 = vmatpush1.msra.mxu0 0.0
    %543 = vmatprep.subr.mxu0 0.0
    %544 = vmatpush1.msra.mxu0 0.0
    %545 = vmatprep.subr.mxu0 0.0
    %546 = vmatpush1.msra.mxu0 0.0
    %547 = vmatprep.subr.mxu0 0.0
    %548 = vmatpush1.msra.mxu0 0.0
    %549 = vmatprep.subr.mxu0 0.0
    %550 = vmatpush1.msra.mxu0 0.0
    %551 = vmatprep.subr.mxu0 0.0
    %552 = vmatpush1.msra.mxu0 0.0
    %553 = vmatprep.subr.mxu0 0.0
    %554 = vmatpush1.msra.mxu0 0.0
    %555 = vmatprep.subr.mxu0 0.0
    %556 = vmatpush1.msra.mxu0 0.0
    %557 = vmatprep.subr.mxu0 0.0
    %558 = vmatpush1.msra.mxu0 0.0
    %559 = vmatprep.subr.mxu0 0.0
    %560 = vmatpush1.msra.mxu0 0.0
    %561 = vmatprep.subr.mxu0 0.0
    %562 = vmatpush1.msra.mxu0 0.0
    %563 = vmatprep.subr.mxu0 0.0
    %564 = vmatpush1.msra.mxu0 0.0
    %565 = vmatprep.subr.mxu0 0.0
    %566 = vmatpush1.msra.mxu0 0.0
    %567 = vmatprep.subr.mxu0 0.0
    %568 = vmatpush1.msra.mxu0 0.0
    %569 = vmatprep.subr.mxu0 0.0
    %570 = vmatpush1.msra.mxu0 0.0
    %571 = vmatprep.subr.mxu0 0.0
    %572 = vmatpush1.msra.mxu0 0.0
    %573 = vmatprep.subr.mxu0 0.0
    %574 = vmatpush1.msra.mxu0 0.0
    %575 = vmatprep.mubr.f32.mxu0 0.0
    %576 = vmatmul.mubr.f32.gmra.mrb[0].mxu0 %v271
    %v577 = vpop.f32.mrb[0].mxu0
    %v578 = vadd.f32 %v508, %v577
    %v579 = vpop.f32.mrb[0].mxu0
    %580 = vdwg.mxu0
    %v581 = vadd.f32 %v578, %v89
    %v582 = vxor.u32 %v581, 2147483648
    %v583 = vmul.f32 %v582, 1.442695
    %v584 = vpow.pop %v583
    %v585 = vadd.f32 %v584, 1.0
    %v586 = vrcp.pop %v585
    %v587 = vmul.f32 1.0, %v586
    %v588 = vtanh.pop %v581
    %v589 = vmul.f32 %v587, %v261
    %591 = vrot.lane.b32.xlu0 %v588, 64
    %v592 = vpop.permute.xlu0 %591
    %v594 = vmul.f32 %v587, %v592
    %596 = vrot.lane.b32.xlu0 %v594, 32
    %v597 = vpop.permute.xlu0 %596
    %v599 = vadd.f32 %v589, %v597
    %v600 = vtanh.pop %v599
    %602 = vrot.lane.b32.xlu0 %v600, 64
    %v603 = vpop.permute.xlu0 %602
    %v605 = vmul.f32 %v587, %v603
    %607 = vrot.lane.b32.xlu0 %v605, 32
    %v608 = vpop.permute.xlu0 %607
    %v609 = vsel %vm99, %v608, 0
    %611 = vmatprep.subr.mxu0 0.0
    %612 = vmatpush1.xpose.msra.mxu0 %v274
    %613 = vmatprep.subr.mxu0 0.0
    %614 = vmatpush1.xpose.msra.mxu0 %v277
    %615 = vmatprep.subr.mxu0 0.0
    %616 = vmatpush1.xpose.msra.mxu0 0.0
    %617 = vmatprep.subr.mxu0 0.0
    %618 = vmatpush1.xpose.msra.mxu0 0.0
    %619 = vmatprep.subr.mxu0 0.0
    %620 = vmatpush1.xpose.msra.mxu0 0.0
    %621 = vmatprep.subr.mxu0 0.0
    %622 = vmatpush1.xpose.msra.mxu0 0.0
    %623 = vmatprep.subr.mxu0 0.0
    %624 = vmatpush1.xpose.msra.mxu0 0.0
    %625 = vmatprep.subr.mxu0 0.0
    %626 = vmatpush1.xpose.msra.mxu0 0.0
    %627 = vmatprep.subr.mxu0 0.0
    %628 = vmatpush1.xpose.msra.mxu0 0.0
    %629 = vmatprep.subr.mxu0 0.0
    %630 = vmatpush1.xpose.msra.mxu0 0.0
    %631 = vmatprep.subr.mxu0 0.0
    %632 = vmatpush1.xpose.msra.mxu0 0.0
    %633 = vmatprep.subr.mxu0 0.0
    %634 = vmatpush1.xpose.msra.mxu0 0.0
    %635 = vmatprep.subr.mxu0 0.0
    %636 = vmatpush1.xpose.msra.mxu0 0.0
    %637 = vmatprep.subr.mxu0 0.0
    %638 = vmatpush1.xpose.msra.mxu0 0.0
    %639 = vmatprep.subr.mxu0 0.0
    %640 = vmatpush1.xpose.msra.mxu0 0.0
    %641 = vmatprep.subr.mxu0 0.0
    %642 = vmatpush1.xpose.msra.mxu0 0.0
    %643 = vmatprep.subr.mxu0 0.0
    %644 = vmatpush1.xpose.msra.mxu0 0.0
    %645 = vmatprep.subr.mxu0 0.0
    %646 = vmatpush1.xpose.msra.mxu0 0.0
    %647 = vmatprep.subr.mxu0 0.0
    %648 = vmatpush1.xpose.msra.mxu0 0.0
    %649 = vmatprep.subr.mxu0 0.0
    %650 = vmatpush1.xpose.msra.mxu0 0.0
    %651 = vmatprep.subr.mxu0 0.0
    %652 = vmatpush1.xpose.msra.mxu0 0.0
    %653 = vmatprep.subr.mxu0 0.0
    %654 = vmatpush1.xpose.msra.mxu0 0.0
    %655 = vmatprep.subr.mxu0 0.0
    %656 = vmatpush1.xpose.msra.mxu0 0.0
    %657 = vmatprep.subr.mxu0 0.0
    %658 = vmatpush1.xpose.msra.mxu0 0.0
    %659 = vmatprep.subr.mxu0 0.0
    %660 = vmatpush1.xpose.msra.mxu0 0.0
    %661 = vmatprep.subr.mxu0 0.0
    %662 = vmatpush1.xpose.msra.mxu0 0.0
    %663 = vmatprep.subr.mxu0 0.0
    %664 = vmatpush1.xpose.msra.mxu0 0.0
    %665 = vmatprep.subr.mxu0 0.0
    %666 = vmatpush1.xpose.msra.mxu0 0.0
    %667 = vmatprep.subr.mxu0 0.0
    %668 = vmatpush1.xpose.msra.mxu0 0.0
    %669 = vmatprep.subr.mxu0 0.0
    %670 = vmatpush1.xpose.msra.mxu0 0.0
    %671 = vmatprep.subr.mxu0 0.0
    %672 = vmatpush1.xpose.msra.mxu0 0.0
    %673 = vmatprep.subr.mxu0 0.0
    %674 = vmatpush1.xpose.msra.mxu0 0.0
    %675 = vmatprep.mubr.f32.mxu0 0.0
    %676 = vmatmul.mubr.f32.gmra.mrb[0].mxu0 %v609
    %v677 = vpop.f32.mrb[0].mxu0
    %v678 = vadd.f32 0.0, %v677
    %v679 = vpop.f32.mrb[0].mxu0
    %680 = vdwg.mxu0
    %v681 = vsel %vm98, %v678, -1e+30
    %v682 = vsel %vm350, %v681, -inf
    %683 = vmax.xlane.f32.xlu0 %v682
    %v684 = vpop.xlane.xlu0 %683
    %v685 = vsub.f32 %v681, %v684
    %v686 = vmul.f32 %v685, 1.442695
    %v687 = vpow.pop %v686
    %v688 = vsel %vm98, %v687, 0.0
    %v689 = vsel %vm350, %v688, 0.0
    %690 = vadd.xlane.f32.xlu0 %v689
    %v691 = vpop.xlane.xlu0 %690
    %v693 = vsel %vm361, %v688, 0
    %695 = vmatprep.subr.mxu0 0.0
    %696 = vmatpush1.msra.mxu0 %v74
    %697 = vmatprep.subr.mxu0 0.0
    %698 = vmatpush1.msra.mxu0 %v75
    %699 = vmatprep.subr.mxu0 0.0
    %700 = vmatpush1.msra.mxu0 0.0
    %701 = vmatprep.subr.mxu0 0.0
    %702 = vmatpush1.msra.mxu0 0.0
    %703 = vmatprep.subr.mxu0 0.0
    %704 = vmatpush1.msra.mxu0 0.0
    %705 = vmatprep.subr.mxu0 0.0
    %706 = vmatpush1.msra.mxu0 0.0
    %707 = vmatprep.subr.mxu0 0.0
    %708 = vmatpush1.msra.mxu0 0.0
    %709 = vmatprep.subr.mxu0 0.0
    %710 = vmatpush1.msra.mxu0 0.0
    %711 = vmatprep.subr.mxu0 0.0
    %712 = vmatpush1.msra.mxu0 0.0
    %713 = vmatprep.subr.mxu0 0.0
    %714 = vmatpush1.msra.mxu0 0.0
    %715 = vmatprep.subr.mxu0 0.0
    %716 = vmatpush1.msra.mxu0 0.0
    %717 = vmatprep.subr.mxu0 0.0
    %718 = vmatpush1.msra.mxu0 0.0
    %719 = vmatprep.subr.mxu0 0.0
    %720 = vmatpush1.msra.mxu0 0.0
    %721 = vmatprep.subr.mxu0 0.0
    %722 = vmatpush1.msra.mxu0 0.0
    %723 = vmatprep.subr.mxu0 0.0
    %724 = vmatpush1.msra.mxu0 0.0
    %725 = vmatprep.subr.mxu0 0.0
    %726 = vmatpush1.msra.mxu0 0.0
    %727 = vmatprep.subr.mxu0 0.0
    %728 = vmatpush1.msra.mxu0 0.0
    %729 = vmatprep.subr.mxu0 0.0
    %730 = vmatpush1.msra.mxu0 0.0
    %731 = vmatprep.subr.mxu0 0.0
    %732 = vmatpush1.msra.mxu0 0.0
    %733 = vmatprep.subr.mxu0 0.0
    %734 = vmatpush1.msra.mxu0 0.0
    %735 = vmatprep.subr.mxu0 0.0
    %736 = vmatpush1.msra.mxu0 0.0
    %737 = vmatprep.subr.mxu0 0.0
    %738 = vmatpush1.msra.mxu0 0.0
    %739 = vmatprep.subr.mxu0 0.0
    %740 = vmatpush1.msra.mxu0 0.0
    %741 = vmatprep.subr.mxu0 0.0
    %742 = vmatpush1.msra.mxu0 0.0
    %743 = vmatprep.subr.mxu0 0.0
    %744 = vmatpush1.msra.mxu0 0.0
    %745 = vmatprep.subr.mxu0 0.0
    %746 = vmatpush1.msra.mxu0 0.0
    %747 = vmatprep.subr.mxu0 0.0
    %748 = vmatpush1.msra.mxu0 0.0
    %749 = vmatprep.subr.mxu0 0.0
    %750 = vmatpush1.msra.mxu0 0.0
    %751 = vmatprep.subr.mxu0 0.0
    %752 = vmatpush1.msra.mxu0 0.0
    %753 = vmatprep.subr.mxu0 0.0
    %754 = vmatpush1.msra.mxu0 0.0
    %755 = vmatprep.subr.mxu0 0.0
    %756 = vmatpush1.msra.mxu0 0.0
    %757 = vmatprep.subr.mxu0 0.0
    %758 = vmatpush1.msra.mxu0 0.0
    %759 = vmatprep.mubr.f32.mxu0 0.0
    %760 = vmatmul.mubr.f32.gmra.mrb[0].mxu0 %v693
    %v761 = vpop.f32.mrb[0].mxu0
    %v762 = vadd.f32 0.0, %v761
    %v763 = vpop.f32.mrb[0].mxu0
    %764 = vdwg.mxu0
    %v765 = vmax.f32 %v691, 1e-30
    %v766 = vrcp.pop %v765
    %v767 = vmul.f32 %v762, %v766
    %v769 = vsel %vm99, %v767, 0
    %771 = vmatprep.subr.mxu0 0.0
    %772 = vmatpush1.msra.mxu0 %v80
    %773 = vmatprep.subr.mxu0 0.0
    %774 = vmatpush1.msra.mxu0 %v81
    %775 = vmatprep.subr.mxu0 0.0
    %776 = vmatpush1.msra.mxu0 %v82
    %777 = vmatprep.subr.mxu0 0.0
    %778 = vmatpush1.msra.mxu0 %v83
    %779 = vmatprep.subr.mxu0 0.0
    %780 = vmatpush1.msra.mxu0 0.0
    %781 = vmatprep.subr.mxu0 0.0
    %782 = vmatpush1.msra.mxu0 0.0
    %783 = vmatprep.subr.mxu0 0.0
    %784 = vmatpush1.msra.mxu0 0.0
    %785 = vmatprep.subr.mxu0 0.0
    %786 = vmatpush1.msra.mxu0 0.0
    %787 = vmatprep.subr.mxu0 0.0
    %788 = vmatpush1.msra.mxu0 0.0
    %789 = vmatprep.subr.mxu0 0.0
    %790 = vmatpush1.msra.mxu0 0.0
    %791 = vmatprep.subr.mxu0 0.0
    %792 = vmatpush1.msra.mxu0 0.0
    %793 = vmatprep.subr.mxu0 0.0
    %794 = vmatpush1.msra.mxu0 0.0
    %795 = vmatprep.subr.mxu0 0.0
    %796 = vmatpush1.msra.mxu0 0.0
    %797 = vmatprep.subr.mxu0 0.0
    %798 = vmatpush1.msra.mxu0 0.0
    %799 = vmatprep.subr.mxu0 0.0
    %800 = vmatpush1.msra.mxu0 0.0
    %801 = vmatprep.subr.mxu0 0.0
    %802 = vmatpush1.msra.mxu0 0.0
    %803 = vmatprep.subr.mxu0 0.0
    %804 = vmatpush1.msra.mxu0 0.0
    %805 = vmatprep.subr.mxu0 0.0
    %806 = vmatpush1.msra.mxu0 0.0
    %807 = vmatprep.subr.mxu0 0.0
    %808 = vmatpush1.msra.mxu0 0.0
    %809 = vmatprep.subr.mxu0 0.0
    %810 = vmatpush1.msra.mxu0 0.0
    %811 = vmatprep.subr.mxu0 0.0
    %812 = vmatpush1.msra.mxu0 0.0
    %813 = vmatprep.subr.mxu0 0.0
    %814 = vmatpush1.msra.mxu0 0.0
    %815 = vmatprep.subr.mxu0 0.0
    %816 = vmatpush1.msra.mxu0 0.0
    %817 = vmatprep.subr.mxu0 0.0
    %818 = vmatpush1.msra.mxu0 0.0
    %819 = vmatprep.subr.mxu0 0.0
    %820 = vmatpush1.msra.mxu0 0.0
    %821 = vmatprep.subr.mxu0 0.0
    %822 = vmatpush1.msra.mxu0 0.0
    %823 = vmatprep.subr.mxu0 0.0
    %824 = vmatpush1.msra.mxu0 0.0
    %825 = vmatprep.subr.mxu0 0.0
    %826 = vmatpush1.msra.mxu0 0.0
    %827 = vmatprep.subr.mxu0 0.0
    %828 = vmatpush1.msra.mxu0 0.0
    %829 = vmatprep.subr.mxu0 0.0
    %830 = vmatpush1.msra.mxu0 0.0
    %831 = vmatprep.subr.mxu0 0.0
    %832 = vmatpush1.msra.mxu0 0.0
    %833 = vmatprep.subr.mxu0 0.0
    %834 = vmatpush1.msra.mxu0 0.0
    %835 = vmatprep.mubr.f32.mxu0 0.0
    %836 = vmatmul.mubr.f32.gmra.mrb[0].mxu0 %v769
    %v837 = vpop.f32.mrb[0].mxu0
    %v838 = vadd.f32 0.0, %v837
    %v839 = vpop.f32.mrb[0].mxu0
    %840 = vdwg.mxu0
    %841 = vmatprep.subr.mxu0 0.0
    %842 = vmatpush1.msra.mxu0 %v76
    %843 = vmatprep.subr.mxu0 0.0
    %844 = vmatpush1.msra.mxu0 %v77
    %845 = vmatprep.subr.mxu0 0.0
    %846 = vmatpush1.msra.mxu0 %v78
    %847 = vmatprep.subr.mxu0 0.0
    %848 = vmatpush1.msra.mxu0 %v79
    %849 = vmatprep.subr.mxu0 0.0
    %850 = vmatpush1.msra.mxu0 0.0
    %851 = vmatprep.subr.mxu0 0.0
    %852 = vmatpush1.msra.mxu0 0.0
    %853 = vmatprep.subr.mxu0 0.0
    %854 = vmatpush1.msra.mxu0 0.0
    %855 = vmatprep.subr.mxu0 0.0
    %856 = vmatpush1.msra.mxu0 0.0
    %857 = vmatprep.subr.mxu0 0.0
    %858 = vmatpush1.msra.mxu0 0.0
    %859 = vmatprep.subr.mxu0 0.0
    %860 = vmatpush1.msra.mxu0 0.0
    %861 = vmatprep.subr.mxu0 0.0
    %862 = vmatpush1.msra.mxu0 0.0
    %863 = vmatprep.subr.mxu0 0.0
    %864 = vmatpush1.msra.mxu0 0.0
    %865 = vmatprep.subr.mxu0 0.0
    %866 = vmatpush1.msra.mxu0 0.0
    %867 = vmatprep.subr.mxu0 0.0
    %868 = vmatpush1.msra.mxu0 0.0
    %869 = vmatprep.subr.mxu0 0.0
    %870 = vmatpush1.msra.mxu0 0.0
    %871 = vmatprep.subr.mxu0 0.0
    %872 = vmatpush1.msra.mxu0 0.0
    %873 = vmatprep.subr.mxu0 0.0
    %874 = vmatpush1.msra.mxu0 0.0
    %875 = vmatprep.subr.mxu0 0.0
    %876 = vmatpush1.msra.mxu0 0.0
    %877 = vmatprep.subr.mxu0 0.0
    %878 = vmatpush1.msra.mxu0 0.0
    %879 = vmatprep.subr.mxu0 0.0
    %880 = vmatpush1.msra.mxu0 0.0
    %881 = vmatprep.subr.mxu0 0.0
    %882 = vmatpush1.msra.mxu0 0.0
    %883 = vmatprep.subr.mxu0 0.0
    %884 = vmatpush1.msra.mxu0 0.0
    %885 = vmatprep.subr.mxu0 0.0
    %886 = vmatpush1.msra.mxu0 0.0
    %887 = vmatprep.subr.mxu0 0.0
    %888 = vmatpush1.msra.mxu0 0.0
    %889 = vmatprep.subr.mxu0 0.0
    %890 = vmatpush1.msra.mxu0 0.0
    %891 = vmatprep.subr.mxu0 0.0
    %892 = vmatpush1.msra.mxu0 0.0
    %893 = vmatprep.subr.mxu0 0.0
    %894 = vmatpush1.msra.mxu0 0.0
    %895 = vmatprep.subr.mxu0 0.0
    %896 = vmatpush1.msra.mxu0 0.0
    %897 = vmatprep.subr.mxu0 0.0
    %898 = vmatpush1.msra.mxu0 0.0
    %899 = vmatprep.subr.mxu0 0.0
    %900 = vmatpush1.msra.mxu0 0.0
    %901 = vmatprep.subr.mxu0 0.0
    %902 = vmatpush1.msra.mxu0 0.0
    %903 = vmatprep.subr.mxu0 0.0
    %904 = vmatpush1.msra.mxu0 0.0
    %905 = vmatprep.mubr.f32.mxu0 0.0
    %906 = vmatmul.mubr.f32.gmra.mrb[0].mxu0 %v609
    %v907 = vpop.f32.mrb[0].mxu0
    %v908 = vadd.f32 %v838, %v907
    %v909 = vpop.f32.mrb[0].mxu0
    %910 = vdwg.mxu0
    %v911 = vadd.f32 %v908, %v89
    %v912 = vxor.u32 %v911, 2147483648
    %v913 = vmul.f32 %v912, 1.442695
    %v914 = vpow.pop %v913
    %v915 = vadd.f32 %v914, 1.0
    %v916 = vrcp.pop %v915
    %v917 = vmul.f32 1.0, %v916
    %v918 = vtanh.pop %v911
    %v919 = vmul.f32 %v917, %v599
    %921 = vrot.lane.b32.xlu0 %v918, 64
    %v922 = vpop.permute.xlu0 %921
    %v924 = vmul.f32 %v917, %v922
    %926 = vrot.lane.b32.xlu0 %v924, 32
    %v927 = vpop.permute.xlu0 %926
    %v929 = vadd.f32 %v919, %v927
    %v930 = vtanh.pop %v929
    %932 = vrot.lane.b32.xlu0 %v930, 64
    %v933 = vpop.permute.xlu0 %932
    %v935 = vmul.f32 %v917, %v933
    %937 = vrot.lane.b32.xlu0 %v935, 32
    %v938 = vpop.permute.xlu0 %937
    %v939 = vsel %vm99, %v938, 0
    %941 = vmatprep.subr.mxu0 0.0
    %942 = vmatpush1.xpose.msra.mxu0 %v274
    %943 = vmatprep.subr.mxu0 0.0
    %944 = vmatpush1.xpose.msra.mxu0 %v277
    %945 = vmatprep.subr.mxu0 0.0
    %946 = vmatpush1.xpose.msra.mxu0 0.0
    %947 = vmatprep.subr.mxu0 0.0
    %948 = vmatpush1.xpose.msra.mxu0 0.0
    %949 = vmatprep.subr.mxu0 0.0
    %950 = vmatpush1.xpose.msra.mxu0 0.0
    %951 = vmatprep.subr.mxu0 0.0
    %952 = vmatpush1.xpose.msra.mxu0 0.0
    %953 = vmatprep.subr.mxu0 0.0
    %954 = vmatpush1.xpose.msra.mxu0 0.0
    %955 = vmatprep.subr.mxu0 0.0
    %956 = vmatpush1.xpose.msra.mxu0 0.0
    %957 = vmatprep.subr.mxu0 0.0
    %958 = vmatpush1.xpose.msra.mxu0 0.0
    %959 = vmatprep.subr.mxu0 0.0
    %960 = vmatpush1.xpose.msra.mxu0 0.0
    %961 = vmatprep.subr.mxu0 0.0
    %962 = vmatpush1.xpose.msra.mxu0 0.0
    %963 = vmatprep.subr.mxu0 0.0
    %964 = vmatpush1.xpose.msra.mxu0 0.0
    %965 = vmatprep.subr.mxu0 0.0
    %966 = vmatpush1.xpose.msra.mxu0 0.0
    %967 = vmatprep.subr.mxu0 0.0
    %968 = vmatpush1.xpose.msra.mxu0 0.0
    %969 = vmatprep.subr.mxu0 0.0
    %970 = vmatpush1.xpose.msra.mxu0 0.0
    %971 = vmatprep.subr.mxu0 0.0
    %972 = vmatpush1.xpose.msra.mxu0 0.0
    %973 = vmatprep.subr.mxu0 0.0
    %974 = vmatpush1.xpose.msra.mxu0 0.0
    %975 = vmatprep.subr.mxu0 0.0
    %976 = vmatpush1.xpose.msra.mxu0 0.0
    %977 = vmatprep.subr.mxu0 0.0
    %978 = vmatpush1.xpose.msra.mxu0 0.0
    %979 = vmatprep.subr.mxu0 0.0
    %980 = vmatpush1.xpose.msra.mxu0 0.0
    %981 = vmatprep.subr.mxu0 0.0
    %982 = vmatpush1.xpose.msra.mxu0 0.0
    %983 = vmatprep.subr.mxu0 0.0
    %984 = vmatpush1.xpose.msra.mxu0 0.0
    %985 = vmatprep.subr.mxu0 0.0
    %986 = vmatpush1.xpose.msra.mxu0 0.0
    %987 = vmatprep.subr.mxu0 0.0
    %988 = vmatpush1.xpose.msra.mxu0 0.0
    %989 = vmatprep.subr.mxu0 0.0
    %990 = vmatpush1.xpose.msra.mxu0 0.0
    %991 = vmatprep.subr.mxu0 0.0
    %992 = vmatpush1.xpose.msra.mxu0 0.0
    %993 = vmatprep.subr.mxu0 0.0
    %994 = vmatpush1.xpose.msra.mxu0 0.0
    %995 = vmatprep.subr.mxu0 0.0
    %996 = vmatpush1.xpose.msra.mxu0 0.0
    %997 = vmatprep.subr.mxu0 0.0
    %998 = vmatpush1.xpose.msra.mxu0 0.0
    %999 = vmatprep.subr.mxu0 0.0
    %1000 = vmatpush1.xpose.msra.mxu0 0.0
    %1001 = vmatprep.subr.mxu0 0.0
    %1002 = vmatpush1.xpose.msra.mxu0 0.0
    %1003 = vmatprep.subr.mxu0 0.0
    %1004 = vmatpush1.xpose.msra.mxu0 0.0
    %1005 = vmatprep.mubr.f32.mxu0 0.0
    %1006 = vmatmul.mubr.f32.gmra.mrb[0].mxu0 %v939
    %v1007 = vpop.f32.mrb[0].mxu0
    %v1008 = vadd.f32 0.0, %v1007
    %v1009 = vpop.f32.mrb[0].mxu0
    %1010 = vdwg.mxu0
    %v1011 = vsel %vm98, %v1008, -1e+30
    %v1012 = vsel %vm350, %v1011, -inf
    %1013 = vmax.xlane.f32.xlu0 %v1012
    %v1014 = vpop.xlane.xlu0 %1013
    %v1015 = vsub.f32 %v1011, %v1014
    %v1016 = vmul.f32 %v1015, 1.442695
    %v1017 = vpow.pop %v1016
    %v1018 = vsel %vm98, %v1017, 0.0
    %v1019 = vsel %vm350, %v1018, 0.0
    %1020 = vadd.xlane.f32.xlu0 %v1019
    %v1021 = vpop.xlane.xlu0 %1020
    %v1023 = vsel %vm361, %v1018, 0
    %1025 = vmatprep.subr.mxu0 0.0
    %1026 = vmatpush1.msra.mxu0 %v74
    %1027 = vmatprep.subr.mxu0 0.0
    %1028 = vmatpush1.msra.mxu0 %v75
    %1029 = vmatprep.subr.mxu0 0.0
    %1030 = vmatpush1.msra.mxu0 0.0
    %1031 = vmatprep.subr.mxu0 0.0
    %1032 = vmatpush1.msra.mxu0 0.0
    %1033 = vmatprep.subr.mxu0 0.0
    %1034 = vmatpush1.msra.mxu0 0.0
    %1035 = vmatprep.subr.mxu0 0.0
    %1036 = vmatpush1.msra.mxu0 0.0
    %1037 = vmatprep.subr.mxu0 0.0
    %1038 = vmatpush1.msra.mxu0 0.0
    %1039 = vmatprep.subr.mxu0 0.0
    %1040 = vmatpush1.msra.mxu0 0.0
    %1041 = vmatprep.subr.mxu0 0.0
    %1042 = vmatpush1.msra.mxu0 0.0
    %1043 = vmatprep.subr.mxu0 0.0
    %1044 = vmatpush1.msra.mxu0 0.0
    %1045 = vmatprep.subr.mxu0 0.0
    %1046 = vmatpush1.msra.mxu0 0.0
    %1047 = vmatprep.subr.mxu0 0.0
    %1048 = vmatpush1.msra.mxu0 0.0
    %1049 = vmatprep.subr.mxu0 0.0
    %1050 = vmatpush1.msra.mxu0 0.0
    %1051 = vmatprep.subr.mxu0 0.0
    %1052 = vmatpush1.msra.mxu0 0.0
    %1053 = vmatprep.subr.mxu0 0.0
    %1054 = vmatpush1.msra.mxu0 0.0
    %1055 = vmatprep.subr.mxu0 0.0
    %1056 = vmatpush1.msra.mxu0 0.0
    %1057 = vmatprep.subr.mxu0 0.0
    %1058 = vmatpush1.msra.mxu0 0.0
    %1059 = vmatprep.subr.mxu0 0.0
    %1060 = vmatpush1.msra.mxu0 0.0
    %1061 = vmatprep.subr.mxu0 0.0
    %1062 = vmatpush1.msra.mxu0 0.0
    %1063 = vmatprep.subr.mxu0 0.0
    %1064 = vmatpush1.msra.mxu0 0.0
    %1065 = vmatprep.subr.mxu0 0.0
    %1066 = vmatpush1.msra.mxu0 0.0
    %1067 = vmatprep.subr.mxu0 0.0
    %1068 = vmatpush1.msra.mxu0 0.0
    %1069 = vmatprep.subr.mxu0 0.0
    %1070 = vmatpush1.msra.mxu0 0.0
    %1071 = vmatprep.subr.mxu0 0.0
    %1072 = vmatpush1.msra.mxu0 0.0
    %1073 = vmatprep.subr.mxu0 0.0
    %1074 = vmatpush1.msra.mxu0 0.0
    %1075 = vmatprep.subr.mxu0 0.0
    %1076 = vmatpush1.msra.mxu0 0.0
    %1077 = vmatprep.subr.mxu0 0.0
    %1078 = vmatpush1.msra.mxu0 0.0
    %1079 = vmatprep.subr.mxu0 0.0
    %1080 = vmatpush1.msra.mxu0 0.0
    %1081 = vmatprep.subr.mxu0 0.0
    %1082 = vmatpush1.msra.mxu0 0.0
    %1083 = vmatprep.subr.mxu0 0.0
    %1084 = vmatpush1.msra.mxu0 0.0
    %1085 = vmatprep.subr.mxu0 0.0
    %1086 = vmatpush1.msra.mxu0 0.0
    %1087 = vmatprep.subr.mxu0 0.0
    %1088 = vmatpush1.msra.mxu0 0.0
    %1089 = vmatprep.mubr.f32.mxu0 0.0
    %1090 = vmatmul.mubr.f32.gmra.mrb[0].mxu0 %v1023
    %v1091 = vpop.f32.mrb[0].mxu0
    %v1092 = vadd.f32 0.0, %v1091
    %v1093 = vpop.f32.mrb[0].mxu0
    %1094 = vdwg.mxu0
    %v1095 = vmax.f32 %v1021, 1e-30
    %v1096 = vrcp.pop %v1095
    %v1097 = vmul.f32 %v1092, %v1096
    %1100 = vrot.lane.b32.xlu0 %v1097, 32
    %v1101 = vpop.permute.xlu0 %1100
    %v1103 = vsel %vm99, %v938, %v1101
    %vm1104 = vcmask 517120
    %1105 = vst.msk [vmem:[#allocation10] sm:$0x3] %vm1104, %v1103
    // Predicated region
    $region38: #{tpu_custom_call.1} parent=1 // pred_check
      _
    $region39: #{tpu_custom_call.1} parent=1 // pred_check_branch
      %1107 = sbr.rel (0) target = $region41
    $region40: #{tpu_custom_call.1} parent=1 // pred_region
      %s1109 = ssub.s32 32, 32
      %1110 = vsyncadd [#allocation4], %s1109
      %s1112 = sshll.u32 [#allocation10], 4
      %s1113 = int_to_ptr.vmem [resolvable:$true] %s1112
      %1115 = dma.vmem_to_hbm [thread:$0]  %s1113, 32, %s5, [#allocation4]
    $region41: #{tpu_custom_call.1} parent=1 // pred_fallthru
      _
    // Predicated region
    $region42: #{tpu_custom_call.1} parent=1 // pred_check
      _
    $region43: #{tpu_custom_call.1} parent=1 // pred_check_branch
      %1117 = sbr.rel (0) target = $region45
    $region44: #{tpu_custom_call.1} parent=1 // pred_region
      %1118 = dma.done [#allocation4], 32
    $region45: #{tpu_custom_call.1} parent=1 // pred_fallthru
      _
    %1119 = vsyncpa [#allocation3], 1
    %1120 = vsyncpa [#allocation6], 1
    %1121 = vsyncpa [#allocation9], 1
    %1122 = vsyncpa [#allocation4], 1

</llo_original>
